<compile_context>
chip_gen: v7x
topology: tpu7x:2x2x1
jax: 0.10.0
libtpu: 0.0.40
codegen_flags: <defaults>
</compile_context>

<pallas_src>
import jax
import jax.numpy as jnp
from jax import lax
from jax.experimental import pallas as pl
from jax.experimental.pallas import tpu as pltpu


def _cos_distance_kernel(a_ref, b_ref, g_ref, sa_ref, sb_ref):
    # a_ref : (Ba, TK) chunk of a       b_ref : (Bb, TK) chunk of b
    # g_ref : (1, Ba, Bb) partial Gram accumulator for this D-split
    # sa_ref: (1, Ba, 1)  partial sum-of-squares for a rows
    # sb_ref: (1, Bb, 1)  partial sum-of-squares for b rows
    k = pl.program_id(1)

    @pl.when(k == 0)
    def _init():
        g_ref[...] = jnp.zeros_like(g_ref)
        sa_ref[...] = jnp.zeros_like(sa_ref)
        sb_ref[...] = jnp.zeros_like(sb_ref)

    a = a_ref[...]
    b = b_ref[...]

    # Raw Gram chunk  a_blk @ b_blk.T : contract both last (lane) dims.
    # Mosaic feeds this to the MXU as a transposed-RHS matmul, so no per-step
    # XLU transpose of the (Bb, TK) tile is needed.
    g_ref[0] += lax.dot_general(
        a, b,
        dimension_numbers=(((1,), (1,)), ((), ())),
        preferred_element_type=jnp.float32,
    )

    # Squared-norm partials (f32 accumulation), lane reduction over the chunk.
    # (For bf16 inputs the f32 cast doubles the elementwise working set; fine
    #  at these tile sizes — revisit with sub-chunking only if spills appear.)
    af = a.astype(jnp.float32)
    bf = b.astype(jnp.float32)
    sa_ref[0] += jnp.sum(af * af, axis=-1, keepdims=True)
    sb_ref[0] += jnp.sum(bf * bf, axis=-1, keepdims=True)


def _choose_tk(Ba, Bb, D, itemsize):
    """Pick a lane-aligned (multiple-of-128) reduction tile size."""
    d_aligned = pl.cdiv(D, 128) * 128
    # Sublane-padded row counts approximate the true VMEM footprint of a tile.
    Ba_p = pl.cdiv(max(Ba, 1), 8) * 8
    Bb_p = pl.cdiv(max(Bb, 1), 8) * 8

    # 1) Target >= ~2 MiB of raw HBM traffic per grid step so the per-step
    #    overhead and small strided DMAs stop dominating.
    traffic_per_col = max(1, (Ba + Bb) * itemsize)
    tk = (2 * 1024 * 1024) // traffic_per_col
    # 2) ...but no need for more than ~32 reduction steps in total.
    tk = max(tk, pl.cdiv(d_aligned, 32 * 128) * 128)
    # 3) Cap by a conservative VMEM budget for the double-buffered input
    #    tiles (leaves room for the Gram/norm accumulators + headroom and
    #    stays well under v7x's 64 MiB/TC).
    out_accum = 2 * 4 * (Ba_p * max(Bb, 128) + (Ba_p + Bb_p) * 128)
    tile_budget = max(4 * 1024 * 1024, (40 * 1024 * 1024) - out_accum)
    tk_vmem = tile_budget // max(1, 2 * (Ba_p + Bb_p) * itemsize)
    tk = min(tk, tk_vmem, d_aligned)
    # Lane-align and floor at one vreg width.
    tk = max(128, (tk // 128) * 128)
    return int(tk)


def calculate_cos_distance(a, b, *, tk=None):
    """Pallas-backed equivalent of the PyTorch module's forward(a, b)."""
    a2 = a.reshape(a.shape[0], -1)
    b2 = b.reshape(b.shape[0], -1)
    Ba, D = a2.shape
    Bb, Db = b2.shape
    assert D == Db, "a and b must flatten to the same feature dimension"
    assert a2.dtype == b2.dtype, "a and b must share a dtype"

    itemsize = jnp.dtype(a2.dtype).itemsize
    d_aligned = pl.cdiv(D, 128) * 128
    if tk is None:
        tk = _choose_tk(Ba, Bb, D, itemsize)
    else:
        # Round user-provided tk up to a multiple of 128 (lane-dense, unmasked
        # loads) and clamp to the feature extent.
        tk = max(128, min(pl.cdiv(int(tk), 128) * 128, d_aligned))

    # Split the D reduction across two "parallel" grid slices so both v7x
    # TensorCores get work (no-op on single-core v5e/v6e).
    num_k_total = pl.cdiv(d_aligned, tk)
    n_split = 2 if num_k_total >= 2 else 1
    nks = pl.cdiv(num_k_total, n_split)          # K steps per split
    Dp = n_split * nks * tk
    if Dp != D:
        # Zero padding contributes nothing to the Gram matrix or the norms.
        a2 = jnp.pad(a2, ((0, 0), (0, Dp - D)))
        b2 = jnp.pad(b2, ((0, 0), (0, Dp - D)))

    # Explicit VMEM budget: double-buffered input tiles + accumulators
    # (sublane-padded) + headroom; capped so it stays safe on v7x (64 MiB/TC).
    Ba_p = pl.cdiv(Ba, 8) * 8
    Bb_p = pl.cdiv(Bb, 8) * 8
    in_vmem = 2 * (Ba_p + Bb_p) * tk * itemsize
    out_vmem = 2 * 4 * (Ba_p * max(Bb, 128) + (Ba_p + Bb_p) * 128)
    vmem_limit = int(min(max(in_vmem + out_vmem + (8 << 20), 16 << 20), 48 << 20))

    cost = pl.CostEstimate(
        flops=2 * Ba * Bb * Dp + 2 * (Ba + Bb) * Dp,
        transcendentals=0,
        bytes_accessed=(Ba + Bb) * Dp * itemsize
        + n_split * (Ba * Bb + Ba + Bb) * 4,
    )

    # TODO(synk): if Ba*Bb grows ≳ 2K x 2K, tile the Gram output over parallel
    # MXU-aligned row/col blocks (per-block accumulators) instead of one block.
    g_parts, sa_parts, sb_parts = pl.pallas_call(
        _cos_distance_kernel,
        out_shape=(
            jax.ShapeDtypeStruct((n_split, Ba, Bb), jnp.float32),
            jax.ShapeDtypeStruct((n_split, Ba, 1), jnp.float32),
            jax.ShapeDtypeStruct((n_split, Bb, 1), jnp.float32),
        ),
        grid_spec=pltpu.PrefetchScalarGridSpec(
            num_scalar_prefetch=0,
            grid=(n_split, nks),
            in_specs=[
                pl.BlockSpec((Ba, tk), lambda s, k: (0, s * nks + k)),
                pl.BlockSpec((Bb, tk), lambda s, k: (0, s * nks + k)),
            ],
            out_specs=[
                pl.BlockSpec((1, Ba, Bb), lambda s, k: (s, 0, 0)),
                pl.BlockSpec((1, Ba, 1), lambda s, k: (s, 0, 0)),
                pl.BlockSpec((1, Bb, 1), lambda s, k: (s, 0, 0)),
            ],
        ),
        compiler_params=pltpu.CompilerParams(
            dimension_semantics=("parallel", "arbitrary"),
            vmem_limit_bytes=vmem_limit,
        ),
        cost_estimate=cost,
    )(a2, b2)

    # Tiny finalize on the (Ba, Bb) result: combine splits, normalize, mean.
    g = jnp.sum(g_parts, axis=0)                      # (Ba, Bb)
    sa = jnp.sum(sa_parts, axis=0)                    # (Ba, 1)
    sb = jnp.sum(sb_parts, axis=0)                    # (Bb, 1)
    eps = jnp.float32(1e-12)                          # matches F.normalize
    na = jnp.maximum(jnp.sqrt(sa), eps)
    nb = jnp.maximum(jnp.sqrt(sb), eps)
    cose = g / (na * nb.T)
    return jnp.mean(1.0 - cose)


if __name__ == "__main__":
    key = jax.random.PRNGKey(0)
    ka, kb = jax.random.split(key)

    # Small NCHW inputs: batch=2, channels=4, spatial=16x16 -> D = 1024.
    a = jax.random.normal(ka, (2, 4, 16, 16), dtype=jnp.float32)
    b = jax.random.normal(kb, (2, 4, 16, 16), dtype=jnp.float32)

    # Pure-JAX reference.
    def ref(a, b):
        a2 = a.reshape(a.shape[0], -1)
        b2 = b.reshape(b.shape[0], -1)
        an = a2 / jnp.maximum(jnp.linalg.norm(a2, axis=-1, keepdims=True), 1e-12)
        bn = b2 / jnp.maximum(jnp.linalg.norm(b2, axis=-1, keepdims=True), 1e-12)
        return jnp.mean(1.0 - an @ bn.T)

    expected = ref(a, b)

    # 1) Adaptive tiling path (single large K tile for this small D).
    r1 = calculate_cos_distance(a, b)
    jax.block_until_ready(r1)
    assert jnp.allclose(r1, expected, atol=1e-5, rtol=1e-5), (r1, expected)

    # 2) Forced small tile: exercises the multi-step accumulation AND the
    #    2-way parallel D-split + wrapper combine path.
    r2 = calculate_cos_distance(a, b, tk=128)
    jax.block_until_ready(r2)
    assert jnp.allclose(r2, expected, atol=1e-5, rtol=1e-5), (r2, expected)

    print("KERNEL_OK")
</pallas_src>

<mosaic_0001>
module attributes {stable_mosaic.version = 11 : i64} {
  func.func @_cos_distance_kernel(%arg0: i32, %arg1: i32, %arg2: memref<2x1024xf32, #tpu.memory_space<vmem>>, %arg3: memref<2x1024xf32, #tpu.memory_space<vmem>>, %arg4: memref<1x2x2xf32, #tpu.memory_space<vmem>>, %arg5: memref<1x2x1xf32, #tpu.memory_space<vmem>>, %arg6: memref<1x2x1xf32, #tpu.memory_space<vmem>>) attributes {dimension_semantics = [#tpu.dimension_semantics<parallel>, #tpu.dimension_semantics<arbitrary>], iteration_bounds = array<i64: 1, 1>, scalar_prefetch = 0 : i64, scratch_operands = 0 : i64, tpu.core_type = #tpu.core_type<tc>, window_params = [{transform_indices = @transform_0, window_bounds = array<i64: 2, 1024>}, {transform_indices = @transform_1, window_bounds = array<i64: 2, 1024>}, {transform_indices = @transform_2, window_bounds = array<i64: 1, 2, 2>}, {transform_indices = @transform_3, window_bounds = array<i64: 1, 2, 1>}, {transform_indices = @transform_4, window_bounds = array<i64: 1, 2, 1>}]} {
    %c0_i32 = arith.constant 0 : i32
    %0 = arith.cmpi eq, %arg1, %c0_i32 : i32
    %1 = arith.extui %0 : i1 to i32
    %c0_i32_0 = arith.constant 0 : i32
    %2 = arith.cmpi ne, %1, %c0_i32_0 : i32
    scf.if %2 {
      %cst_24 = arith.constant 0.000000e+00 : f32
      %30 = vector.broadcast %cst_24 : f32 to vector<1x2x2xf32>
      %c0_25 = arith.constant 0 : index
      %c0_26 = arith.constant 0 : index
      %c0_27 = arith.constant 0 : index
      %31 = vector.load %arg4[%c0_25, %c0_26, %c0_27] : memref<1x2x2xf32, #tpu.memory_space<vmem>>, vector<1x2x2xf32>
      tpu.vector_store %arg4[%c0_25, %c0_26, %c0_27], %30 {strides = array<i32>} : memref<1x2x2xf32, #tpu.memory_space<vmem>>, vector<1x2x2xf32>,
      %cst_28 = arith.constant 0.000000e+00 : f32
      %32 = vector.broadcast %cst_28 : f32 to vector<1x2x1xf32>
      %c0_29 = arith.constant 0 : index
      %c0_30 = arith.constant 0 : index
      %c0_31 = arith.constant 0 : index
      %33 = vector.load %arg5[%c0_29, %c0_30, %c0_31] : memref<1x2x1xf32, #tpu.memory_space<vmem>>, vector<1x2x1xf32>
      tpu.vector_store %arg5[%c0_29, %c0_30, %c0_31], %32 {strides = array<i32>} : memref<1x2x1xf32, #tpu.memory_space<vmem>>, vector<1x2x1xf32>,
      %cst_32 = arith.constant 0.000000e+00 : f32
      %34 = vector.broadcast %cst_32 : f32 to vector<1x2x1xf32>
      %c0_33 = arith.constant 0 : index
      %c0_34 = arith.constant 0 : index
      %c0_35 = arith.constant 0 : index
      %35 = vector.load %arg6[%c0_33, %c0_34, %c0_35] : memref<1x2x1xf32, #tpu.memory_space<vmem>>, vector<1x2x1xf32>
      tpu.vector_store %arg6[%c0_33, %c0_34, %c0_35], %34 {strides = array<i32>} : memref<1x2x1xf32, #tpu.memory_space<vmem>>, vector<1x2x1xf32>,
    } else {
    }
    %c0 = arith.constant 0 : index
    %c0_1 = arith.constant 0 : index
    %3 = vector.load %arg2[%c0, %c0_1] : memref<2x1024xf32, #tpu.memory_space<vmem>>, vector<2x1024xf32>
    %c0_2 = arith.constant 0 : index
    %c0_3 = arith.constant 0 : index
    %4 = vector.load %arg3[%c0_2, %c0_3] : memref<2x1024xf32, #tpu.memory_space<vmem>>, vector<2x1024xf32>
    %c0_4 = arith.constant 0 : index
    %c0_5 = arith.constant 0 : index
    %c0_6 = arith.constant 0 : index
    %5 = vector.load %arg4[%c0_4, %c0_5, %c0_6] : memref<1x2x2xf32, #tpu.memory_space<vmem>>, vector<1x2x2xf32>
    %6 = vector.shape_cast %5 : vector<1x2x2xf32> to vector<2x2xf32>
    %cst = arith.constant dense<0.000000e+00> : vector<2x2xf32>
    %7 = tpu.matmul %3, %4, %cst {dimension_numbers = #tpu.dot_dimension_numbers<[1], [1], [0], [0], [0, 0, 1, 0], [], []>} : vector<2x1024xf32>, vector<2x1024xf32>, vector<2x2xf32> -> vector<2x2xf32>
    %8 = arith.addf %6, %7 : vector<2x2xf32>
    %c0_7 = arith.constant 0 : index
    %c0_8 = arith.constant 0 : index
    %c0_9 = arith.constant 0 : index
    %9 = vector.load %arg4[%c0_7, %c0_8, %c0_9] : memref<1x2x2xf32, #tpu.memory_space<vmem>>, vector<1x2x2xf32>
    %10 = vector.shape_cast %9 : vector<1x2x2xf32> to vector<2x2xf32>
    %11 = vector.shape_cast %8 : vector<2x2xf32> to vector<1x2x2xf32>
    tpu.vector_store %arg4[%c0_7, %c0_8, %c0_9], %11 {strides = array<i32>} : memref<1x2x2xf32, #tpu.memory_space<vmem>>, vector<1x2x2xf32>,
    %c0_10 = arith.constant 0 : index
    %c0_11 = arith.constant 0 : index
    %c0_12 = arith.constant 0 : index
    %12 = vector.load %arg5[%c0_10, %c0_11, %c0_12] : memref<1x2x1xf32, #tpu.memory_space<vmem>>, vector<1x2x1xf32>
    %13 = vector.shape_cast %12 : vector<1x2x1xf32> to vector<2x1xf32>
    %14 = arith.mulf %3, %3 : vector<2x1024xf32>
    %cst_13 = arith.constant dense<0.000000e+00> : vector<2xf32>
    %15 = vector.multi_reduction <add>, %14, %cst_13 [1] : vector<2x1024xf32> to vector<2xf32>
    %16 = vector.shape_cast %15 : vector<2xf32> to vector<2x1xf32>
    %17 = arith.addf %13, %16 : vector<2x1xf32>
    %c0_14 = arith.constant 0 : index
    %c0_15 = arith.constant 0 : index
    %c0_16 = arith.constant 0 : index
    %18 = vector.load %arg5[%c0_14, %c0_15, %c0_16] : memref<1x2x1xf32, #tpu.memory_space<vmem>>, vector<1x2x1xf32>
    %19 = vector.shape_cast %18 : vector<1x2x1xf32> to vector<2x1xf32>
    %20 = vector.shape_cast %17 : vector<2x1xf32> to vector<1x2x1xf32>
    tpu.vector_store %arg5[%c0_14, %c0_15, %c0_16], %20 {strides = array<i32>} : memref<1x2x1xf32, #tpu.memory_space<vmem>>, vector<1x2x1xf32>,
    %c0_17 = arith.constant 0 : index
    %c0_18 = arith.constant 0 : index
    %c0_19 = arith.constant 0 : index
    %21 = vector.load %arg6[%c0_17, %c0_18, %c0_19] : memref<1x2x1xf32, #tpu.memory_space<vmem>>, vector<1x2x1xf32>
    %22 = vector.shape_cast %21 : vector<1x2x1xf32> to vector<2x1xf32>
    %23 = arith.mulf %4, %4 : vector<2x1024xf32>
    %cst_20 = arith.constant dense<0.000000e+00> : vector<2xf32>
    %24 = vector.multi_reduction <add>, %23, %cst_20 [1] : vector<2x1024xf32> to vector<2xf32>
    %25 = vector.shape_cast %24 : vector<2xf32> to vector<2x1xf32>
    %26 = arith.addf %22, %25 : vector<2x1xf32>
    %c0_21 = arith.constant 0 : index
    %c0_22 = arith.constant 0 : index
    %c0_23 = arith.constant 0 : index
    %27 = vector.load %arg6[%c0_21, %c0_22, %c0_23] : memref<1x2x1xf32, #tpu.memory_space<vmem>>, vector<1x2x1xf32>
    %28 = vector.shape_cast %27 : vector<1x2x1xf32> to vector<2x1xf32>
    %29 = vector.shape_cast %26 : vector<2x1xf32> to vector<1x2x1xf32>
    tpu.vector_store %arg6[%c0_21, %c0_22, %c0_23], %29 {strides = array<i32>} : memref<1x2x1xf32, #tpu.memory_space<vmem>>, vector<1x2x1xf32>,
    return
  }
  func.func @transform_0(%arg0: i32, %arg1: i32) -> (i32, i32) {
    %c1_i32 = arith.constant 1 : i32
    %0 = arith.muli %arg0, %c1_i32 : i32
    %1 = arith.addi %0, %arg1 : i32
    %c0_i32 = arith.constant 0 : i32
    %c0_i32_0 = arith.constant 0 : i32
    return %c0_i32, %1 : i32, i32
  }
  func.func @transform_1(%arg0: i32, %arg1: i32) -> (i32, i32) {
    %c1_i32 = arith.constant 1 : i32
    %0 = arith.muli %arg0, %c1_i32 : i32
    %1 = arith.addi %0, %arg1 : i32
    %c0_i32 = arith.constant 0 : i32
    %c0_i32_0 = arith.constant 0 : i32
    return %c0_i32, %1 : i32, i32
  }
  func.func @transform_2(%arg0: i32, %arg1: i32) -> (i32, i32, i32) {
    %c0_i32 = arith.constant 0 : i32
    %c0_i32_0 = arith.constant 0 : i32
    %c0_i32_1 = arith.constant 0 : i32
    return %arg0, %c0_i32, %c0_i32_0 : i32, i32, i32
  }
  func.func @transform_3(%arg0: i32, %arg1: i32) -> (i32, i32, i32) {
    %c0_i32 = arith.constant 0 : i32
    %c0_i32_0 = arith.constant 0 : i32
    %c0_i32_1 = arith.constant 0 : i32
    return %arg0, %c0_i32, %c0_i32_0 : i32, i32, i32
  }
  func.func @transform_4(%arg0: i32, %arg1: i32) -> (i32, i32, i32) {
    %c0_i32 = arith.constant 0 : i32
    %c0_i32_0 = arith.constant 0 : i32
    %c0_i32_1 = arith.constant 0 : i32
    return %arg0, %c0_i32, %c0_i32_0 : i32, i32, i32
  }
}

</mosaic_0001>

<llo_original>
// kernel: tpu_custom_call.1
$region0: #{tpu_custom_call.1}
  #allocation0 [shape = 'u32[]', space=smem, size = 0x4, offset = 0x4, fixed_abs, tag = 'smem constant byte address 0x4 - core index']
  #allocation1 [shape = 'u32[144,128]{1,0:T(1,128)}', space=vmem, size = 0x12000, scoped, tag = 'internal scratch']
  %s0 = inlined_call_operand.hbm [shape: f32[2,1024], index: 0, kind: input, shape index: {}]
  %s1 = inlined_call_operand.hbm [shape: f32[2,1024], index: 1, kind: input, shape index: {}]
  %s2 = inlined_call_operand.hbm [shape: f32[1,2,2], index: 2, kind: output, shape index: {0}]
  %s3 = inlined_call_operand.vmem [shape: f32[1,2,1], index: 3, kind: output, shape index: {1}]
  %s4 = inlined_call_operand.vmem [shape: f32[1,2,1], index: 4, kind: output, shape index: {2}]
  %5 = xla_tuple %s2, %s3, %s4
  %s6 = sld [smem:[#allocation0]]
  $region46: #{tpu_custom_call.1} parent=0
    _
  %s8 = ssub.s32 1, %s6
  %s9 = scalar_select 0, %s8, %s6
  $region1: #{tpu_custom_call.1} parent=0
    #allocation2 [shape = 'u8[8192]{0}', space=vmem, size = 0x2000, scoped, tag = 'input window, operand 0, single buffered']
    #allocation3 [shape = 's32[1]{0}', space=sflag, size = 0x4, scoped, tag = 'scoped memory for tpu_custom_call.1']
    #allocation4 [shape = 's32[1]{0}', space=sflag, size = 0x4, scoped, tag = 'scoped memory for tpu_custom_call.1']
    #allocation5 [shape = 'u8[8192]{0}', space=vmem, size = 0x2000, scoped, tag = 'input window, operand 1, single buffered']
    #allocation6 [shape = 's32[1]{0}', space=sflag, size = 0x4, scoped, tag = 'scoped memory for tpu_custom_call.1']
    #allocation7 [shape = 'u8[1024]{0}', space=vmem, size = 0x400, scoped, tag = 'output window, operand 0, single buffered']
    %10 = vsyncpa [#allocation3], 0
    %11 = vsyncpa [#allocation6], 0
    %12 = vsyncpa [#allocation4], 0
    // Predicated region
    $region2: #{tpu_custom_call.1} parent=1 // pred_check
      _
    $region3: #{tpu_custom_call.1} parent=1 // pred_check_branch
      %14 = sbr.rel (0) target = $region5
    $region4: #{tpu_custom_call.1} parent=1 // pred_region
      %s15 = sadd.s32 0, 0
      %s16 = smul.u32 8, %s15
      %s18 = ssub.s32 256, 256
      %19 = vsyncadd [#allocation3], %s18
      %s20 = smul.addr %s16, 32
      %s21 = scalar_lea.hbm %s0, %s20
      %s23 = sshll.u32 [#allocation2], 4
      %s24 = int_to_ptr.vmem [resolvable:$true] %s23
      %26 = dma.hbm_to_vmem [thread:$0]  %s21, 256, %s24, [#allocation3]
    $region5: #{tpu_custom_call.1} parent=1 // pred_fallthru
      _
    // Predicated region
    $region6: #{tpu_custom_call.1} parent=1 // pred_check
      _
    $region7: #{tpu_custom_call.1} parent=1 // pred_check_branch
      %28 = sbr.rel (0) target = $region9
    $region8: #{tpu_custom_call.1} parent=1 // pred_region
      %s29 = sadd.s32 0, 0
      %s30 = smul.u32 8, %s29
      %s32 = ssub.s32 256, 256
      %33 = vsyncadd [#allocation6], %s32
      %s34 = smul.addr %s30, 32
      %s35 = scalar_lea.hbm %s1, %s34
      %s37 = sshll.u32 [#allocation5], 4
      %s38 = int_to_ptr.vmem [resolvable:$true] %s37
      %40 = dma.hbm_to_vmem [thread:$0]  %s35, 256, %s38, [#allocation6]
    $region9: #{tpu_custom_call.1} parent=1 // pred_fallthru
      _
    // Predicated region
    $region10: #{tpu_custom_call.1} parent=1 // pred_check
      _
    $region11: #{tpu_custom_call.1} parent=1 // pred_check_branch
      %42 = sbr.rel (0) target = $region13
    $region12: #{tpu_custom_call.1} parent=1 // pred_region
      %43 = dma.done [#allocation3], 256
    $region13: #{tpu_custom_call.1} parent=1 // pred_fallthru
      _
    // Predicated region
    $region14: #{tpu_custom_call.1} parent=1 // pred_check
      _
    $region15: #{tpu_custom_call.1} parent=1 // pred_check_branch
      %45 = sbr.rel (0) target = $region17
    $region16: #{tpu_custom_call.1} parent=1 // pred_region
      %46 = dma.done [#allocation6], 256
    $region17: #{tpu_custom_call.1} parent=1 // pred_fallthru
      _
    %s47 = sadd.s32 0, 0
    %s48 = smul.u32 8, %s47
    %s49 = sadd.s32 0, 0
    %s50 = smul.u32 8, %s49
    %p51 = scmp.eq.s32.totalorder 0, 0
    // Predicated region
    $region18: #{tpu_custom_call.1} parent=1 // pred_check
      %p52 = pneg %p51
    $region19: #{tpu_custom_call.1} parent=1 // pred_check_branch
      %54 = sbr.rel (%p52) target = $region21
    $region20: #{tpu_custom_call.1} parent=1 // pred_region
      %vm55 = vcmask 9216
      %56 = vst.msk [vmem:[#allocation7] sm:$0x3] %vm55, 0.0
      %vm57 = vcmask 1024
      %58 = vst.msk [vmem:[%s3] sm:$0x3] %vm57, 0.0
      %59 = vst.msk [vmem:[%s4] sm:$0x3] %vm57, 0.0
    $region21: #{tpu_custom_call.1} parent=1 // pred_fallthru
      _
    %v60 = vld [vmem:[#allocation2] sm:$0xff]
    %v61 = vld [vmem:[#allocation2 + $0x8] sm:$0xff]
    %v62 = vld [vmem:[#allocation5] sm:$0xff]
    %v63 = vld [vmem:[#allocation5 + $0x8] sm:$0xff]
    %v64 = vld [vmem:[#allocation7] sm:$0x3]
    %v67 = vcombine.high %v60, %v60
    %v69 = vunpack.c.l.s4 1983009808
    %v70 = vunpack.c.0.s8 %v69
    %v71 = vlaneseq
    %v72 = vshrl.u32 %v71, 7
    %v73 = vsub.s32 %v70, %v72
    %v74 = vrot.slane %v60, %v73
    %v76 = vunpack.c.l.s4 1983009808
    %v77 = vunpack.c.0.s8 %v76
    %v78 = vlaneseq
    %v79 = vshrl.u32 %v78, 7
    %v80 = vsub.s32 %v77, %v79
    %v81 = vrot.slane %v67, %v80
    %v82 = vcombine.high %v74, %v74
    %v83 = vcombine.high %v81, %v81
    %v84 = vcombine.high %v61, %v61
    %v86 = vunpack.c.l.s4 1983009808
    %v87 = vunpack.c.0.s8 %v86
    %v88 = vlaneseq
    %v89 = vshrl.u32 %v88, 7
    %v90 = vsub.s32 %v87, %v89
    %v91 = vrot.slane %v61, %v90
    %v93 = vunpack.c.l.s4 1983009808
    %v94 = vunpack.c.0.s8 %v93
    %v95 = vlaneseq
    %v96 = vshrl.u32 %v95, 7
    %v97 = vsub.s32 %v94, %v96
    %v98 = vrot.slane %v84, %v97
    %v99 = vcombine.high %v91, %v91
    %v100 = vcombine.high %v98, %v98
    %v111 = vcombine.high %v62, %v62
    %v113 = vunpack.c.l.s4 1983009808
    %v114 = vunpack.c.0.s8 %v113
    %v115 = vlaneseq
    %v116 = vshrl.u32 %v115, 7
    %v117 = vsub.s32 %v114, %v116
    %v118 = vrot.slane %v62, %v117
    %v120 = vunpack.c.l.s4 1983009808
    %v121 = vunpack.c.0.s8 %v120
    %v122 = vlaneseq
    %v123 = vshrl.u32 %v122, 7
    %v124 = vsub.s32 %v121, %v123
    %v125 = vrot.slane %v111, %v124
    %v126 = vcombine.high %v118, %v118
    %v127 = vcombine.high %v125, %v125
    %v128 = vcombine.high %v63, %v63
    %v130 = vunpack.c.l.s4 1983009808
    %v131 = vunpack.c.0.s8 %v130
    %v132 = vlaneseq
    %v133 = vshrl.u32 %v132, 7
    %v134 = vsub.s32 %v131, %v133
    %v135 = vrot.slane %v63, %v134
    %v137 = vunpack.c.l.s4 1983009808
    %v138 = vunpack.c.0.s8 %v137
    %v139 = vlaneseq
    %v140 = vshrl.u32 %v139, 7
    %v141 = vsub.s32 %v138, %v140
    %v142 = vrot.slane %v128, %v141
    %v143 = vcombine.high %v135, %v135
    %v144 = vcombine.high %v142, %v142
    %153 = vmatprep.subr.mxu0 %v126
    %154 = vmatpush1.xpose.msra.mxu0 %v118
    %155 = vmatprep.subr.mxu0 0.0
    %156 = vmatpush1.xpose.msra.mxu0 0.0
    %157 = vmatprep.subr.mxu0 0.0
    %158 = vmatpush1.xpose.msra.mxu0 0.0
    %159 = vmatprep.subr.mxu0 0.0
    %160 = vmatpush1.xpose.msra.mxu0 0.0
    %161 = vmatprep.subr.mxu0 0.0
    %162 = vmatpush1.xpose.msra.mxu0 0.0
    %163 = vmatprep.subr.mxu0 0.0
    %164 = vmatpush1.xpose.msra.mxu0 0.0
    %165 = vmatprep.subr.mxu0 0.0
    %166 = vmatpush1.xpose.msra.mxu0 0.0
    %167 = vmatprep.subr.mxu0 0.0
    %168 = vmatpush1.xpose.msra.mxu0 0.0
    %169 = vmatprep.subr.mxu0 0.0
    %170 = vmatpush1.xpose.msra.mxu0 0.0
    %171 = vmatprep.subr.mxu0 0.0
    %172 = vmatpush1.xpose.msra.mxu0 0.0
    %173 = vmatprep.subr.mxu0 0.0
    %174 = vmatpush1.xpose.msra.mxu0 0.0
    %175 = vmatprep.subr.mxu0 0.0
    %176 = vmatpush1.xpose.msra.mxu0 0.0
    %177 = vmatprep.subr.mxu0 0.0
    %178 = vmatpush1.xpose.msra.mxu0 0.0
    %179 = vmatprep.subr.mxu0 0.0
    %180 = vmatpush1.xpose.msra.mxu0 0.0
    %181 = vmatprep.subr.mxu0 0.0
    %182 = vmatpush1.xpose.msra.mxu0 0.0
    %183 = vmatprep.subr.mxu0 0.0
    %184 = vmatpush1.xpose.msra.mxu0 0.0
    %185 = vmatprep.subr.mxu0 0.0
    %186 = vmatpush1.xpose.msra.mxu0 0.0
    %187 = vmatprep.subr.mxu0 0.0
    %188 = vmatpush1.xpose.msra.mxu0 0.0
    %189 = vmatprep.subr.mxu0 0.0
    %190 = vmatpush1.xpose.msra.mxu0 0.0
    %191 = vmatprep.subr.mxu0 0.0
    %192 = vmatpush1.xpose.msra.mxu0 0.0
    %193 = vmatprep.subr.mxu0 0.0
    %194 = vmatpush1.xpose.msra.mxu0 0.0
    %195 = vmatprep.subr.mxu0 0.0
    %196 = vmatpush1.xpose.msra.mxu0 0.0
    %197 = vmatprep.subr.mxu0 0.0
    %198 = vmatpush1.xpose.msra.mxu0 0.0
    %199 = vmatprep.subr.mxu0 0.0
    %200 = vmatpush1.xpose.msra.mxu0 0.0
    %201 = vmatprep.subr.mxu0 0.0
    %202 = vmatpush1.xpose.msra.mxu0 0.0
    %203 = vmatprep.subr.mxu0 0.0
    %204 = vmatpush1.xpose.msra.mxu0 0.0
    %205 = vmatprep.subr.mxu0 0.0
    %206 = vmatpush1.xpose.msra.mxu0 0.0
    %207 = vmatprep.subr.mxu0 0.0
    %208 = vmatpush1.xpose.msra.mxu0 0.0
    %209 = vmatprep.subr.mxu0 0.0
    %210 = vmatpush1.xpose.msra.mxu0 0.0
    %211 = vmatprep.subr.mxu0 0.0
    %212 = vmatpush1.xpose.msra.mxu0 0.0
    %213 = vmatprep.subr.mxu0 0.0
    %214 = vmatpush1.xpose.msra.mxu0 0.0
    %215 = vmatprep.subr.mxu0 0.0
    %216 = vmatpush1.xpose.msra.mxu0 0.0
    %217 = vmatprep.mubr.f32.mxu0 %v82
    %218 = vmatmul.mubr.f32.gmra.mrb[0].mxu0 %v74
    %v219 = vpop.f32.mrb[0].mxu0
    %v220 = vadd.f32 0.0, %v219
    %v221 = vpop.f32.mrb[0].mxu0
    %222 = vdwg.mxu0
    %223 = vmatprep.subr.mxu0 %v127
    %224 = vmatpush1.xpose.msra.mxu0 %v125
    %225 = vmatprep.subr.mxu0 0.0
    %226 = vmatpush1.xpose.msra.mxu0 0.0
    %227 = vmatprep.subr.mxu0 0.0
    %228 = vmatpush1.xpose.msra.mxu0 0.0
    %229 = vmatprep.subr.mxu0 0.0
    %230 = vmatpush1.xpose.msra.mxu0 0.0
    %231 = vmatprep.subr.mxu0 0.0
    %232 = vmatpush1.xpose.msra.mxu0 0.0
    %233 = vmatprep.subr.mxu0 0.0
    %234 = vmatpush1.xpose.msra.mxu0 0.0
    %235 = vmatprep.subr.mxu0 0.0
    %236 = vmatpush1.xpose.msra.mxu0 0.0
    %237 = vmatprep.subr.mxu0 0.0
    %238 = vmatpush1.xpose.msra.mxu0 0.0
    %239 = vmatprep.subr.mxu0 0.0
    %240 = vmatpush1.xpose.msra.mxu0 0.0
    %241 = vmatprep.subr.mxu0 0.0
    %242 = vmatpush1.xpose.msra.mxu0 0.0
    %243 = vmatprep.subr.mxu0 0.0
    %244 = vmatpush1.xpose.msra.mxu0 0.0
    %245 = vmatprep.subr.mxu0 0.0
    %246 = vmatpush1.xpose.msra.mxu0 0.0
    %247 = vmatprep.subr.mxu0 0.0
    %248 = vmatpush1.xpose.msra.mxu0 0.0
    %249 = vmatprep.subr.mxu0 0.0
    %250 = vmatpush1.xpose.msra.mxu0 0.0
    %251 = vmatprep.subr.mxu0 0.0
    %252 = vmatpush1.xpose.msra.mxu0 0.0
    %253 = vmatprep.subr.mxu0 0.0
    %254 = vmatpush1.xpose.msra.mxu0 0.0
    %255 = vmatprep.subr.mxu0 0.0
    %256 = vmatpush1.xpose.msra.mxu0 0.0
    %257 = vmatprep.subr.mxu0 0.0
    %258 = vmatpush1.xpose.msra.mxu0 0.0
    %259 = vmatprep.subr.mxu0 0.0
    %260 = vmatpush1.xpose.msra.mxu0 0.0
    %261 = vmatprep.subr.mxu0 0.0
    %262 = vmatpush1.xpose.msra.mxu0 0.0
    %263 = vmatprep.subr.mxu0 0.0
    %264 = vmatpush1.xpose.msra.mxu0 0.0
    %265 = vmatprep.subr.mxu0 0.0
    %266 = vmatpush1.xpose.msra.mxu0 0.0
    %267 = vmatprep.subr.mxu0 0.0
    %268 = vmatpush1.xpose.msra.mxu0 0.0
    %269 = vmatprep.subr.mxu0 0.0
    %270 = vmatpush1.xpose.msra.mxu0 0.0
    %271 = vmatprep.subr.mxu0 0.0
    %272 = vmatpush1.xpose.msra.mxu0 0.0
    %273 = vmatprep.subr.mxu0 0.0
    %274 = vmatpush1.xpose.msra.mxu0 0.0
    %275 = vmatprep.subr.mxu0 0.0
    %276 = vmatpush1.xpose.msra.mxu0 0.0
    %277 = vmatprep.subr.mxu0 0.0
    %278 = vmatpush1.xpose.msra.mxu0 0.0
    %279 = vmatprep.subr.mxu0 0.0
    %280 = vmatpush1.xpose.msra.mxu0 0.0
    %281 = vmatprep.subr.mxu0 0.0
    %282 = vmatpush1.xpose.msra.mxu0 0.0
    %283 = vmatprep.subr.mxu0 0.0
    %284 = vmatpush1.xpose.msra.mxu0 0.0
    %285 = vmatprep.subr.mxu0 0.0
    %286 = vmatpush1.xpose.msra.mxu0 0.0
    %287 = vmatprep.mubr.f32.mxu0 %v83
    %288 = vmatmul.mubr.f32.gmra.mrb[0].mxu0 %v81
    %v289 = vpop.f32.mrb[0].mxu0
    %v290 = vadd.f32 %v220, %v289
    %v291 = vpop.f32.mrb[0].mxu0
    %292 = vdwg.mxu0
    %293 = vmatprep.subr.mxu0 %v143
    %294 = vmatpush1.xpose.msra.mxu0 %v135
    %295 = vmatprep.subr.mxu0 0.0
    %296 = vmatpush1.xpose.msra.mxu0 0.0
    %297 = vmatprep.subr.mxu0 0.0
    %298 = vmatpush1.xpose.msra.mxu0 0.0
    %299 = vmatprep.subr.mxu0 0.0
    %300 = vmatpush1.xpose.msra.mxu0 0.0
    %301 = vmatprep.subr.mxu0 0.0
    %302 = vmatpush1.xpose.msra.mxu0 0.0
    %303 = vmatprep.subr.mxu0 0.0
    %304 = vmatpush1.xpose.msra.mxu0 0.0
    %305 = vmatprep.subr.mxu0 0.0
    %306 = vmatpush1.xpose.msra.mxu0 0.0
    %307 = vmatprep.subr.mxu0 0.0
    %308 = vmatpush1.xpose.msra.mxu0 0.0
    %309 = vmatprep.subr.mxu0 0.0
    %310 = vmatpush1.xpose.msra.mxu0 0.0
    %311 = vmatprep.subr.mxu0 0.0
    %312 = vmatpush1.xpose.msra.mxu0 0.0
    %313 = vmatprep.subr.mxu0 0.0
    %314 = vmatpush1.xpose.msra.mxu0 0.0
    %315 = vmatprep.subr.mxu0 0.0
    %316 = vmatpush1.xpose.msra.mxu0 0.0
    %317 = vmatprep.subr.mxu0 0.0
    %318 = vmatpush1.xpose.msra.mxu0 0.0
    %319 = vmatprep.subr.mxu0 0.0
    %320 = vmatpush1.xpose.msra.mxu0 0.0
    %321 = vmatprep.subr.mxu0 0.0
    %322 = vmatpush1.xpose.msra.mxu0 0.0
    %323 = vmatprep.subr.mxu0 0.0
    %324 = vmatpush1.xpose.msra.mxu0 0.0
    %325 = vmatprep.subr.mxu0 0.0
    %326 = vmatpush1.xpose.msra.mxu0 0.0
    %327 = vmatprep.subr.mxu0 0.0
    %328 = vmatpush1.xpose.msra.mxu0 0.0
    %329 = vmatprep.subr.mxu0 0.0
    %330 = vmatpush1.xpose.msra.mxu0 0.0
    %331 = vmatprep.subr.mxu0 0.0
    %332 = vmatpush1.xpose.msra.mxu0 0.0
    %333 = vmatprep.subr.mxu0 0.0
    %334 = vmatpush1.xpose.msra.mxu0 0.0
    %335 = vmatprep.subr.mxu0 0.0
    %336 = vmatpush1.xpose.msra.mxu0 0.0
    %337 = vmatprep.subr.mxu0 0.0
    %338 = vmatpush1.xpose.msra.mxu0 0.0
    %339 = vmatprep.subr.mxu0 0.0
    %340 = vmatpush1.xpose.msra.mxu0 0.0
    %341 = vmatprep.subr.mxu0 0.0
    %342 = vmatpush1.xpose.msra.mxu0 0.0
    %343 = vmatprep.subr.mxu0 0.0
    %344 = vmatpush1.xpose.msra.mxu0 0.0
    %345 = vmatprep.subr.mxu0 0.0
    %346 = vmatpush1.xpose.msra.mxu0 0.0
    %347 = vmatprep.subr.mxu0 0.0
    %348 = vmatpush1.xpose.msra.mxu0 0.0
    %349 = vmatprep.subr.mxu0 0.0
    %350 = vmatpush1.xpose.msra.mxu0 0.0
    %351 = vmatprep.subr.mxu0 0.0
    %352 = vmatpush1.xpose.msra.mxu0 0.0
    %353 = vmatprep.subr.mxu0 0.0
    %354 = vmatpush1.xpose.msra.mxu0 0.0
    %355 = vmatprep.subr.mxu0 0.0
    %356 = vmatpush1.xpose.msra.mxu0 0.0
    %357 = vmatprep.mubr.f32.mxu0 %v99
    %358 = vmatmul.mubr.f32.gmra.mrb[0].mxu0 %v91
    %v359 = vpop.f32.mrb[0].mxu0
    %v360 = vadd.f32 %v290, %v359
    %v361 = vpop.f32.mrb[0].mxu0
    %362 = vdwg.mxu0
    %363 = vmatprep.subr.mxu0 %v144
    %364 = vmatpush1.xpose.msra.mxu0 %v142
    %365 = vmatprep.subr.mxu0 0.0
    %366 = vmatpush1.xpose.msra.mxu0 0.0
    %367 = vmatprep.subr.mxu0 0.0
    %368 = vmatpush1.xpose.msra.mxu0 0.0
    %369 = vmatprep.subr.mxu0 0.0
    %370 = vmatpush1.xpose.msra.mxu0 0.0
    %371 = vmatprep.subr.mxu0 0.0
    %372 = vmatpush1.xpose.msra.mxu0 0.0
    %373 = vmatprep.subr.mxu0 0.0
    %374 = vmatpush1.xpose.msra.mxu0 0.0
    %375 = vmatprep.subr.mxu0 0.0
    %376 = vmatpush1.xpose.msra.mxu0 0.0
    %377 = vmatprep.subr.mxu0 0.0
    %378 = vmatpush1.xpose.msra.mxu0 0.0
    %379 = vmatprep.subr.mxu0 0.0
    %380 = vmatpush1.xpose.msra.mxu0 0.0
    %381 = vmatprep.subr.mxu0 0.0
    %382 = vmatpush1.xpose.msra.mxu0 0.0
    %383 = vmatprep.subr.mxu0 0.0
    %384 = vmatpush1.xpose.msra.mxu0 0.0
    %385 = vmatprep.subr.mxu0 0.0
    %386 = vmatpush1.xpose.msra.mxu0 0.0
    %387 = vmatprep.subr.mxu0 0.0
    %388 = vmatpush1.xpose.msra.mxu0 0.0
    %389 = vmatprep.subr.mxu0 0.0
    %390 = vmatpush1.xpose.msra.mxu0 0.0
    %391 = vmatprep.subr.mxu0 0.0
    %392 = vmatpush1.xpose.msra.mxu0 0.0
    %393 = vmatprep.subr.mxu0 0.0
    %394 = vmatpush1.xpose.msra.mxu0 0.0
    %395 = vmatprep.subr.mxu0 0.0
    %396 = vmatpush1.xpose.msra.mxu0 0.0
    %397 = vmatprep.subr.mxu0 0.0
    %398 = vmatpush1.xpose.msra.mxu0 0.0
    %399 = vmatprep.subr.mxu0 0.0
    %400 = vmatpush1.xpose.msra.mxu0 0.0
    %401 = vmatprep.subr.mxu0 0.0
    %402 = vmatpush1.xpose.msra.mxu0 0.0
    %403 = vmatprep.subr.mxu0 0.0
    %404 = vmatpush1.xpose.msra.mxu0 0.0
    %405 = vmatprep.subr.mxu0 0.0
    %406 = vmatpush1.xpose.msra.mxu0 0.0
    %407 = vmatprep.subr.mxu0 0.0
    %408 = vmatpush1.xpose.msra.mxu0 0.0
    %409 = vmatprep.subr.mxu0 0.0
    %410 = vmatpush1.xpose.msra.mxu0 0.0
    %411 = vmatprep.subr.mxu0 0.0
    %412 = vmatpush1.xpose.msra.mxu0 0.0
    %413 = vmatprep.subr.mxu0 0.0
    %414 = vmatpush1.xpose.msra.mxu0 0.0
    %415 = vmatprep.subr.mxu0 0.0
    %416 = vmatpush1.xpose.msra.mxu0 0.0
    %417 = vmatprep.subr.mxu0 0.0
    %418 = vmatpush1.xpose.msra.mxu0 0.0
    %419 = vmatprep.subr.mxu0 0.0
    %420 = vmatpush1.xpose.msra.mxu0 0.0
    %421 = vmatprep.subr.mxu0 0.0
    %422 = vmatpush1.xpose.msra.mxu0 0.0
    %423 = vmatprep.subr.mxu0 0.0
    %424 = vmatpush1.xpose.msra.mxu0 0.0
    %425 = vmatprep.subr.mxu0 0.0
    %426 = vmatpush1.xpose.msra.mxu0 0.0
    %427 = vmatprep.mubr.f32.mxu0 %v100
    %428 = vmatmul.mubr.f32.gmra.mrb[0].mxu0 %v98
    %v429 = vpop.f32.mrb[0].mxu0
    %v430 = vadd.f32 %v360, %v429
    %v431 = vpop.f32.mrb[0].mxu0
    %432 = vdwg.mxu0
    %v433 = vadd.f32 %v64, %v430
    %vm434 = vcmask 9216
    %435 = vst.msk [vmem:[#allocation7] sm:$0x3] %vm434, %v433
    %v436 = vld [vmem:[%s3] sm:$0x3]
    %v437 = vmul.f32 %v60, %v60
    %v438 = vmul.f32 %v61, %v61
    %v441 = vcombine.high %v437, %v437
    %v443 = vunpack.c.l.s4 1983009808
    %v444 = vunpack.c.0.s8 %v443
    %v445 = vlaneseq
    %v446 = vshrl.u32 %v445, 7
    %v447 = vsub.s32 %v444, %v446
    %v448 = vrot.slane %v437, %v447
    %v450 = vunpack.c.l.s4 1983009808
    %v451 = vunpack.c.0.s8 %v450
    %v452 = vlaneseq
    %v453 = vshrl.u32 %v452, 7
    %v454 = vsub.s32 %v451, %v453
    %v455 = vrot.slane %v441, %v454
    %v456 = vcombine.high %v448, %v448
    %v457 = vcombine.high %v455, %v455
    %v458 = vcombine.high %v438, %v438
    %v460 = vunpack.c.l.s4 1983009808
    %v461 = vunpack.c.0.s8 %v460
    %v462 = vlaneseq
    %v463 = vshrl.u32 %v462, 7
    %v464 = vsub.s32 %v461, %v463
    %v465 = vrot.slane %v438, %v464
    %v467 = vunpack.c.l.s4 1983009808
    %v468 = vunpack.c.0.s8 %v467
    %v469 = vlaneseq
    %v470 = vshrl.u32 %v469, 7
    %v471 = vsub.s32 %v468, %v470
    %v472 = vrot.slane %v458, %v471
    %v473 = vcombine.high %v465, %v465
    %v474 = vcombine.high %v472, %v472
    %vm483 = vcmask 1041408
    %v484 = vsel %vm483, %v448, 0.0
    %v485 = vsel %vm483, %v456, 0.0
    %v486 = vadd.f32 %v484, %v485
    %v487 = vsel %vm483, %v455, 0.0
    %v488 = vadd.f32 %v486, %v487
    %v489 = vsel %vm483, %v457, 0.0
    %v490 = vadd.f32 %v488, %v489
    %v491 = vsel %vm483, %v465, 0.0
    %v492 = vadd.f32 %v490, %v491
    %v493 = vsel %vm483, %v473, 0.0
    %v494 = vadd.f32 %v492, %v493
    %v495 = vsel %vm483, %v472, 0.0
    %v496 = vadd.f32 %v494, %v495
    %v497 = vsel %vm483, %v474, 0.0
    %v498 = vadd.f32 %v496, %v497
    %499 = vadd.xlane.f32.xlu0 %v498
    %v500 = vpop.xlane.xlu0 %499
    %v501 = vadd.f32 %v436, %v500
    %vm502 = vcmask 1024
    %503 = vst.msk [vmem:[%s3] sm:$0x3] %vm502, %v501
    %v504 = vld [vmem:[%s4] sm:$0x3]
    %v505 = vmul.f32 %v62, %v62
    %v506 = vmul.f32 %v63, %v63
    %v509 = vcombine.high %v505, %v505
    %v511 = vunpack.c.l.s4 1983009808
    %v512 = vunpack.c.0.s8 %v511
    %v513 = vlaneseq
    %v514 = vshrl.u32 %v513, 7
    %v515 = vsub.s32 %v512, %v514
    %v516 = vrot.slane %v505, %v515
    %v518 = vunpack.c.l.s4 1983009808
    %v519 = vunpack.c.0.s8 %v518
    %v520 = vlaneseq
    %v521 = vshrl.u32 %v520, 7
    %v522 = vsub.s32 %v519, %v521
    %v523 = vrot.slane %v509, %v522
    %v524 = vcombine.high %v516, %v516
    %v525 = vcombine.high %v523, %v523
    %v526 = vcombine.high %v506, %v506
    %v528 = vunpack.c.l.s4 1983009808
    %v529 = vunpack.c.0.s8 %v528
    %v530 = vlaneseq
    %v531 = vshrl.u32 %v530, 7
    %v532 = vsub.s32 %v529, %v531
    %v533 = vrot.slane %v506, %v532
    %v535 = vunpack.c.l.s4 1983009808
    %v536 = vunpack.c.0.s8 %v535
    %v537 = vlaneseq
    %v538 = vshrl.u32 %v537, 7
    %v539 = vsub.s32 %v536, %v538
    %v540 = vrot.slane %v526, %v539
    %v541 = vcombine.high %v533, %v533
    %v542 = vcombine.high %v540, %v540
    %v551 = vsel %vm483, %v516, 0.0
    %v552 = vsel %vm483, %v524, 0.0
    %v553 = vadd.f32 %v551, %v552
    %v554 = vsel %vm483, %v523, 0.0
    %v555 = vadd.f32 %v553, %v554
    %v556 = vsel %vm483, %v525, 0.0
    %v557 = vadd.f32 %v555, %v556
    %v558 = vsel %vm483, %v533, 0.0
    %v559 = vadd.f32 %v557, %v558
    %v560 = vsel %vm483, %v541, 0.0
    %v561 = vadd.f32 %v559, %v560
    %v562 = vsel %vm483, %v540, 0.0
    %v563 = vadd.f32 %v561, %v562
    %v564 = vsel %vm483, %v542, 0.0
    %v565 = vadd.f32 %v563, %v564
    %566 = vadd.xlane.f32.xlu0 %v565
    %v567 = vpop.xlane.xlu0 %566
    %v568 = vadd.f32 %v504, %v567
    %569 = vst.msk [vmem:[%s4] sm:$0x3] %vm502, %v568
    // Predicated region
    $region22: #{tpu_custom_call.1} parent=1 // pred_check
      _
    $region23: #{tpu_custom_call.1} parent=1 // pred_check_branch
      %571 = sbr.rel (0) target = $region25
    $region24: #{tpu_custom_call.1} parent=1 // pred_region
      %s573 = ssub.s32 32, 32
      %574 = vsyncadd [#allocation4], %s573
      %s576 = sshll.u32 [#allocation7], 4
      %s577 = int_to_ptr.vmem [resolvable:$true] %s576
      %579 = dma.vmem_to_hbm [thread:$0]  %s577, 32, %s2, [#allocation4]
    $region25: #{tpu_custom_call.1} parent=1 // pred_fallthru
      _
    // Predicated region
    $region26: #{tpu_custom_call.1} parent=1 // pred_check
      _
    $region27: #{tpu_custom_call.1} parent=1 // pred_check_branch
      %581 = sbr.rel (0) target = $region29
    $region28: #{tpu_custom_call.1} parent=1 // pred_region
      _
    $region29: #{tpu_custom_call.1} parent=1 // pred_fallthru
      _
    // Predicated region
    $region30: #{tpu_custom_call.1} parent=1 // pred_check
      _
    $region31: #{tpu_custom_call.1} parent=1 // pred_check_branch
      %583 = sbr.rel (0) target = $region33
    $region32: #{tpu_custom_call.1} parent=1 // pred_region
      _
    $region33: #{tpu_custom_call.1} parent=1 // pred_fallthru
      _
    // Predicated region
    $region34: #{tpu_custom_call.1} parent=1 // pred_check
      _
    $region35: #{tpu_custom_call.1} parent=1 // pred_check_branch
      %585 = sbr.rel (0) target = $region37
    $region36: #{tpu_custom_call.1} parent=1 // pred_region
      %586 = dma.done [#allocation4], 32
    $region37: #{tpu_custom_call.1} parent=1 // pred_fallthru
      _
    // Predicated region
    $region38: #{tpu_custom_call.1} parent=1 // pred_check
      _
    $region39: #{tpu_custom_call.1} parent=1 // pred_check_branch
      %588 = sbr.rel (0) target = $region41
    $region40: #{tpu_custom_call.1} parent=1 // pred_region
      _
    $region41: #{tpu_custom_call.1} parent=1 // pred_fallthru
      _
    // Predicated region
    $region42: #{tpu_custom_call.1} parent=1 // pred_check
      _
    $region43: #{tpu_custom_call.1} parent=1 // pred_check_branch
      %590 = sbr.rel (0) target = $region45
    $region44: #{tpu_custom_call.1} parent=1 // pred_region
      _
    $region45: #{tpu_custom_call.1} parent=1 // pred_fallthru
      _
    %591 = vsyncpa [#allocation3], 1
    %592 = vsyncpa [#allocation6], 1
    %593 = vsyncpa [#allocation4], 1

</llo_original>
